<compile_context>
chip_gen: v7x
topology: tpu7x:2x2x1
jax: 0.10.0
libtpu: 0.0.40
codegen_flags: <defaults>
</compile_context>

<pallas_src>
import math

import jax
import jax.numpy as jnp
from jax import lax
from jax.experimental import pallas as pl
from jax.experimental.pallas import tpu as pltpu


_LOG2E = 1.4426950408889634

# Tile-size targets (clamped to the actual dims at call time).
_TM_TARGET = 512      # token-rows per block for the projection matmuls
_TQ_TARGET = 512      # query tile for flash attention
_TKV_TARGET = 1024    # kv tile for flash attention

_VMEM_LIMIT_CACHE = None


def _vmem_limit_bytes():
    """Per-generation VMEM budget: 75% of physical, capped, safe fallback."""
    global _VMEM_LIMIT_CACHE
    if _VMEM_LIMIT_CACHE is None:
        limit = 48 * 1024 * 1024          # safe on v5e / v6e / v7x
        try:
            phys = int(pltpu.get_tpu_info().vmem_capacity_bytes)
            limit = min((phys * 3) // 4, 96 * 1024 * 1024)
        except Exception:
            pass
        _VMEM_LIMIT_CACHE = limit
    return _VMEM_LIMIT_CACHE


def _sublane_unit(dtype):
    itemsize = jnp.dtype(dtype).itemsize
    if itemsize >= 4:
        return 8
    if itemsize == 2:
        return 16
    return 32


def _round_up(v, m):
    return ((v + m - 1) // m) * m


def _pick_tile(dim, target, unit):
    """Tile size for `dim`: whole dim if small, else `target` if it divides,
    else the largest multiple of `unit` that divides, else the full dim."""
    if dim <= target:
        return dim
    if dim % target == 0:
        return target
    t = (target // unit) * unit
    while t >= unit:
        if dim % t == 0:
            return t
        t -= unit
    return dim


def _softmax_dtype_for(dtype):
    """bf16 exp on v6e/v7x when running in bf16; f32 otherwise (incl. v5e)."""
    if jnp.dtype(dtype) != jnp.dtype(jnp.bfloat16):
        return jnp.float32
    try:
        kind = jax.devices()[0].device_kind.lower()
    except Exception:
        kind = ""
    if "v5" in kind:            # v5e has no bf16 EUP path
        return jnp.float32
    return jnp.bfloat16


# ----------------------------------------------------------------------------
# Kernel 1: head-blocked projection with VMEM-resident weights.
#   x: (M, K) @ w2d: (K, G*d)  ->  (G, M, d)   head-major output.
# Used for Q (scale * log2e pre-folded) and the fused K|V pass (G = 2h).
# ----------------------------------------------------------------------------
def _make_proj_heads_kernel(groups, head_dim):
    def kernel(x_ref, w_ref, o_ref):
        # One wide MXU dot (N = groups*head_dim is lane-dense), f32 accumulate.
        y = jnp.dot(x_ref[...], w_ref[...],
                    preferred_element_type=jnp.float32).astype(o_ref.dtype)
        for g in range(groups):                     # static unrolled head split
            o_ref[g] = y[:, g * head_dim:(g + 1) * head_dim]
    return kernel


def pallas_project_heads(x, w2d, groups, head_dim):
    m_dim, k_dim = x.shape
    k2, gd = w2d.shape
    assert k2 == k_dim and gd == groups * head_dim
    sub = _sublane_unit(x.dtype)
    tm = _pick_tile(m_dim, _TM_TARGET, sub)
    grid = (m_dim // tm,)
    bytes_per = x.dtype.itemsize
    return pl.pallas_call(
        _make_proj_heads_kernel(groups, head_dim),
        out_shape=jax.ShapeDtypeStruct((groups, m_dim, head_dim), x.dtype),
        grid_spec=pltpu.PrefetchScalarGridSpec(
            num_scalar_prefetch=0,
            grid=grid,
            in_specs=[
                pl.BlockSpec((tm, k_dim), lambda i: (i, 0)),
                # Fully VMEM-resident weights (constant block index -> one DMA).
                pl.BlockSpec((k_dim, gd), lambda i: (0, 0)),
            ],
            out_specs=pl.BlockSpec((groups, tm, head_dim), lambda i: (0, i, 0)),
        ),
        compiler_params=pltpu.CompilerParams(
            dimension_semantics=("parallel",),
            vmem_limit_bytes=_vmem_limit_bytes()),
        cost_estimate=pl.CostEstimate(
            flops=2 * m_dim * k_dim * gd,
            transcendentals=0,
            bytes_accessed=(x.size + w2d.size + groups * m_dim * head_dim)
            * bytes_per),
    )(x, w2d)


# ----------------------------------------------------------------------------
# Kernel 2: flash attention (base-2 online softmax) with the output projection
# and bias fused into the finalize.  grid = (B, q_tiles, heads, kv_tiles);
# heads and kv are reduction axes over a resident (tq, C) f32 accumulator.
# ----------------------------------------------------------------------------
def pallas_flash_attention_outproj(q_heads, kv_heads, wo3, bias2, *,
                                   batch, q_len, kv_len, kv_valid, heads,
                                   tq, tkv, softmax_dtype, approx_recip):
    h, bn, d = q_heads.shape
    assert h == heads and bn == batch * q_len
    twoh, bm, d2 = kv_heads.shape
    assert twoh == 2 * heads and bm == batch * kv_len and d2 == d
    h2, d3, c_dim = wo3.shape
    assert h2 == heads and d3 == d
    assert q_len % tq == 0 and kv_len % tkv == 0
    n_q = q_len // tq
    n_kv = kv_len // tkv
    mask_kv = kv_valid < kv_len          # static: only emit mask when needed
    compute_dtype = q_heads.dtype

    def kernel(q_ref, k_ref, v_ref, wo_ref, b_ref, o_ref,
               m_sc, l_sc, acc_sc, out_sc):
        hh = pl.program_id(2)
        ki = pl.program_id(3)

        @pl.when(jnp.logical_and(hh == 0, ki == 0))
        def _():
            out_sc[...] = jnp.zeros(out_sc.shape, jnp.float32)

        @pl.when(ki == 0)
        def _():
            m_sc[...] = jnp.full(m_sc.shape, -jnp.inf, jnp.float32)
            l_sc[...] = jnp.zeros(l_sc.shape, jnp.float32)
            acc_sc[...] = jnp.zeros(acc_sc.shape, jnp.float32)

        q = q_ref[0]                     # (tq, d); scale*log2e folded into Wq
        k = k_ref[0]                     # (tkv, d)
        v = v_ref[0]                     # (tkv, d)

        # q @ k^T without materializing k.T: contract last dims on the MXU.
        s = lax.dot_general(q, k, dimension_numbers=(((1,), (1,)), ((), ())),
                            preferred_element_type=jnp.float32)   # (tq, tkv)

        if mask_kv:   # mask padded KV columns (only on padded workloads)
            col = ki * tkv + lax.broadcasted_iota(jnp.int32, s.shape, 1)
            s = jnp.where(col < kv_valid, s, -jnp.inf)

        m_prev = m_sc[...]
        m_new = jnp.maximum(m_prev, jnp.max(s, axis=-1, keepdims=True))
        alpha = jnp.exp2(m_prev - m_new)
        p = jnp.exp2((s - m_new).astype(softmax_dtype))
        l_sc[...] = alpha * l_sc[...] + jnp.sum(p, axis=-1, keepdims=True,
                                                dtype=jnp.float32)
        acc_sc[...] = alpha * acc_sc[...] + jnp.dot(
            p.astype(v.dtype), v, preferred_element_type=jnp.float32)
        m_sc[...] = m_new

        # Per-head finalize: fold the output projection into the kernel.
        @pl.when(ki == pl.num_programs(3) - 1)
        def _():
            inv = pl.reciprocal(l_sc[...], approx=approx_recip)
            attn = (acc_sc[...] * inv).astype(compute_dtype)
            out_sc[...] += jnp.dot(attn, wo_ref[hh],
                                   preferred_element_type=jnp.float32)

        @pl.when(jnp.logical_and(hh == pl.num_programs(2) - 1,
                                 ki == pl.num_programs(3) - 1))
        def _():
            o_ref[...] = (out_sc[...] + b_ref[...]).astype(o_ref.dtype)

    q_map = lambda b, qi, hh, ki: (hh, b * n_q + qi, 0)
    k_map = lambda b, qi, hh, ki: (hh, b * n_kv + ki, 0)
    v_map = lambda b, qi, hh, ki: (heads + hh, b * n_kv + ki, 0)
    wo_map = lambda b, qi, hh, ki: (0, 0, 0)      # resident
    b_map = lambda b, qi, hh, ki: (0, 0)          # resident
    o_map = lambda b, qi, hh, ki: (b * n_q + qi, 0)

    bytes_per = q_heads.dtype.itemsize
    return pl.pallas_call(
        kernel,
        out_shape=jax.ShapeDtypeStruct((batch * q_len, c_dim), q_heads.dtype),
        grid_spec=pltpu.PrefetchScalarGridSpec(
            num_scalar_prefetch=0,
            grid=(batch, n_q, heads, n_kv),
            in_specs=[
                pl.BlockSpec((1, tq, d), q_map),
                pl.BlockSpec((1, tkv, d), k_map),
                pl.BlockSpec((1, tkv, d), v_map),
                pl.BlockSpec((heads, d, c_dim), wo_map),   # resident weights
                pl.BlockSpec((1, c_dim), b_map),           # resident bias (f32)
            ],
            out_specs=pl.BlockSpec((tq, c_dim), o_map),
            scratch_shapes=[
                pltpu.VMEM((tq, 1), jnp.float32),       # running max
                pltpu.VMEM((tq, 1), jnp.float32),       # running denominator
                pltpu.VMEM((tq, d), jnp.float32),       # per-head accumulator
                pltpu.VMEM((tq, c_dim), jnp.float32),   # fused out-proj acc
            ],
        ),
        compiler_params=pltpu.CompilerParams(
            # batch & q-tiles carry the v7x megacore split; heads/kv reduce.
            dimension_semantics=("parallel", "parallel", "arbitrary",
                                 "arbitrary"),
            vmem_limit_bytes=_vmem_limit_bytes()),
        cost_estimate=pl.CostEstimate(
            flops=(4 * batch * heads * q_len * kv_len * d
                   + 2 * batch * heads * q_len * d * c_dim),
            transcendentals=batch * heads * q_len * kv_len,
            bytes_accessed=(q_heads.size * bytes_per
                            + n_q * kv_heads.size * bytes_per   # KV re-read/q-tile
                            + wo3.size * wo3.dtype.itemsize
                            + bias2.size * bias2.dtype.itemsize
                            + batch * q_len * c_dim * bytes_per)),
    )(q_heads, kv_heads, kv_heads, wo3, bias2)


# ----------------------------------------------------------------------------
# CrossAttention module (parameters initialized deterministically in-script).
# ----------------------------------------------------------------------------
class CrossAttention:
    def __init__(self, query_dim, context_dim=None, head_dim=64, heads=8,
                 dropout=0.0, key=None):
        hidden_dim = head_dim * heads
        if context_dim is None:
            context_dim = query_dim
        self.scale = head_dim ** (-0.5)
        self.heads = heads
        self.head_dim = head_dim
        self.hidden_dim = hidden_dim
        self.query_dim = query_dim
        self.context_dim = context_dim
        # TODO(synk): dropout is a no-op here (p=0.0 / eval semantics).

        key = jax.random.PRNGKey(0) if key is None else key
        k1, k2, k3, k4, k5 = jax.random.split(key, 5)

        def lin_init(k, out_f, in_f):
            # PyTorch nn.Linear default: U(-1/sqrt(in_f), 1/sqrt(in_f)),
            # stored as (out_features, in_features).
            bound = 1.0 / math.sqrt(in_f)
            return jax.random.uniform(k, (out_f, in_f), jnp.float32, -bound, bound)

        # PyTorch-layout parameters (kept for the pure-JAX reference).
        self.w_q = lin_init(k1, hidden_dim, query_dim)
        self.w_k = lin_init(k2, hidden_dim, context_dim)
        self.w_v = lin_init(k3, hidden_dim, context_dim)
        self.w_o = lin_init(k4, query_dim, hidden_dim)
        bound = 1.0 / math.sqrt(hidden_dim)
        self.b_o = jax.random.uniform(k5, (query_dim,), jnp.float32, -bound, bound)

        # Kernel-layout parameters, prepared once at init:
        #  * Q weights with softmax scale AND log2(e) folded in (base-2 softmax)
        #  * K & V concatenated column-wise for the fused KV projection pass
        #  * head-major output-projection weights for the fused finalize
        self.wq2 = self.w_q.T * (self.scale * _LOG2E)        # (Cq, h*d)
        self.wkv2 = jnp.concatenate([self.w_k.T, self.w_v.T], axis=1)  # (Cc, 2*h*d)
        self.wo3 = self.w_o.T.reshape(heads, head_dim, query_dim)      # (h, d, Cq)
        self.bias2 = self.b_o.reshape(1, query_dim)           # kept f32

    def __call__(self, x, context=None, mask=None):
        # TODO(synk): mask path not implemented (forward exercised with mask=None).
        assert mask is None
        dtype = x.dtype
        B, N, Cq = x.shape
        assert Cq == self.query_dim
        if context is None:
            context = x
        context = context.astype(dtype)
        _, M, Cc = context.shape
        assert Cc == self.context_dim
        h, d = self.heads, self.head_dim

        # Tile selection + per-batch padding (handles kv_len like 77).
        sub = _sublane_unit(dtype)
        tq = min(_TQ_TARGET, _round_up(N, sub))
        n_pad = _round_up(N, tq)
        tkv = min(_TKV_TARGET, _round_up(M, sub))
        m_pad = _round_up(M, tkv)
        if n_pad != N:
            x = jnp.pad(x, ((0, 0), (0, n_pad - N), (0, 0)))
        if m_pad != M:
            context = jnp.pad(context, ((0, 0), (0, m_pad - M), (0, 0)))

        x2 = x.reshape(B * n_pad, Cq)
        c2 = context.reshape(B * m_pad, Cc)

        # Dtype-matched weights: bf16 activations -> bf16 weights on the MXU.
        wq2 = self.wq2.astype(dtype)
        wkv2 = self.wkv2.astype(dtype)
        wo3 = self.wo3.astype(dtype)

        # Head-major projections (resident weights, activations read once).
        qh = pallas_project_heads(x2, wq2, h, d)            # (h,  B*n_pad, d)
        kvh = pallas_project_heads(c2, wkv2, 2 * h, d)      # (2h, B*m_pad, d)

        # Flash attention + fused output projection + bias.
        y2 = pallas_flash_attention_outproj(
            qh, kvh, wo3, self.bias2,
            batch=B, q_len=n_pad, kv_len=m_pad, kv_valid=M,
            heads=h, tq=tq, tkv=tkv,
            softmax_dtype=_softmax_dtype_for(dtype),
            approx_recip=(jnp.dtype(dtype) == jnp.dtype(jnp.bfloat16)))
        y = y2.reshape(B, n_pad, self.query_dim)
        if n_pad != N:
            y = y[:, :N, :]
        return y


# ----------------------------------------------------------------------------
# Pure-JAX reference for correctness checking (mirrors the PyTorch module).
# ----------------------------------------------------------------------------
def reference_forward(mod, x, context=None):
    if context is None:
        context = x
    B, N, _ = x.shape
    _, M, _ = context.shape
    h, d = mod.heads, mod.head_dim
    q = x @ mod.w_q.T
    k = context @ mod.w_k.T
    v = context @ mod.w_v.T

    def split(t, n):
        return t.reshape(B, n, h, d).transpose(0, 2, 1, 3).reshape(B * h, n, d)

    qh, kh, vh = split(q, N), split(k, M), split(v, M)
    sim = jnp.einsum('bid,bjd->bij', qh, kh) * mod.scale
    attn = jax.nn.softmax(sim, axis=-1)
    out = jnp.einsum('bij,bjd->bid', attn, vh)
    out = out.reshape(B, h, N, d).transpose(0, 2, 1, 3).reshape(B, N, h * d)
    return out @ mod.w_o.T + mod.b_o


if __name__ == "__main__":
    key = jax.random.PRNGKey(0)
    kx, kc, kp = jax.random.split(key, 3)

    B, N, M = 2, 8, 12          # M=12 exercises the padded-KV masking path
    query_dim = 32
    heads, head_dim = 4, 16

    mod = CrossAttention(query_dim, context_dim=None, head_dim=head_dim,
                         heads=heads, key=kp)

    x = jax.random.normal(kx, (B, N, query_dim), jnp.float32)
    ctx = jax.random.normal(kc, (B, M, query_dim), jnp.float32)

    # Self-attention path (context=None, mask=None).
    y_self = jax.block_until_ready(mod(x))
    y_self_ref = reference_forward(mod, x)
    assert y_self.shape == (B, N, query_dim)
    assert jnp.allclose(y_self, y_self_ref, atol=2e-4, rtol=2e-4), \
        "self-attention mismatch vs reference"

    # Cross-attention path with a KV length that is not a multiple of 8.
    y_cross = jax.block_until_ready(mod(x, context=ctx))
    y_cross_ref = reference_forward(mod, x, ctx)
    assert y_cross.shape == (B, N, query_dim)
    assert jnp.allclose(y_cross, y_cross_ref, atol=2e-4, rtol=2e-4), \
        "cross-attention mismatch vs reference"

    print("KERNEL_OK")
</pallas_src>

<mosaic_0001>
module attributes {stable_mosaic.version = 11 : i64} {
  func.func @kernel(%arg0: i32, %arg1: memref<16x32xf32, #tpu.memory_space<vmem>>, %arg2: memref<32x64xf32, #tpu.memory_space<vmem>>, %arg3: memref<4x16x16xf32, #tpu.memory_space<vmem>>) attributes {dimension_semantics = [#tpu.dimension_semantics<parallel>], iteration_bounds = array<i64: 1>, scalar_prefetch = 0 : i64, scratch_operands = 0 : i64, tpu.core_type = #tpu.core_type<tc>, window_params = [{transform_indices = @transform_0, window_bounds = array<i64: 16, 32>}, {pipeline_mode = #tpu.pipeline_mode<synchronous>, transform_indices = @transform_1, window_bounds = array<i64: 32, 64>}, {transform_indices = @transform_2, window_bounds = array<i64: 4, 16, 16>}]} {
    %c0 = arith.constant 0 : index
    %c0_0 = arith.constant 0 : index
    %0 = vector.load %arg1[%c0, %c0_0] : memref<16x32xf32, #tpu.memory_space<vmem>>, vector<16x32xf32>
    %c0_1 = arith.constant 0 : index
    %c0_2 = arith.constant 0 : index
    %1 = vector.load %arg2[%c0_1, %c0_2] : memref<32x64xf32, #tpu.memory_space<vmem>>, vector<32x64xf32>
    %cst = arith.constant dense<0.000000e+00> : vector<16x64xf32>
    %2 = tpu.matmul %0, %1, %cst {dimension_numbers = #tpu.dot_dimension_numbers<[1], [0], [0], [1], [0, 0, 1, 1], [], []>} : vector<16x32xf32>, vector<32x64xf32>, vector<16x64xf32> -> vector<16x64xf32>
    %3 = vector.extract_strided_slice %2 {offsets = [0, 0], sizes = [16, 16], strides = [1, 1]} : vector<16x64xf32> to vector<16x16xf32>
    %c0_3 = arith.constant 0 : index
    %c0_4 = arith.constant 0 : index
    %c0_5 = arith.constant 0 : index
    %4 = vector.load %arg3[%c0_3, %c0_4, %c0_5] : memref<4x16x16xf32, #tpu.memory_space<vmem>>, vector<1x16x16xf32>
    %5 = vector.shape_cast %4 : vector<1x16x16xf32> to vector<16x16xf32>
    %6 = vector.shape_cast %3 : vector<16x16xf32> to vector<1x16x16xf32>
    tpu.vector_store %arg3[%c0_3, %c0_4, %c0_5], %6 {strides = array<i32>} : memref<4x16x16xf32, #tpu.memory_space<vmem>>, vector<1x16x16xf32>,
    %7 = vector.extract_strided_slice %2 {offsets = [0, 16], sizes = [16, 16], strides = [1, 1]} : vector<16x64xf32> to vector<16x16xf32>
    %c1 = arith.constant 1 : index
    %c0_6 = arith.constant 0 : index
    %c0_7 = arith.constant 0 : index
    %8 = vector.load %arg3[%c1, %c0_6, %c0_7] : memref<4x16x16xf32, #tpu.memory_space<vmem>>, vector<1x16x16xf32>
    %9 = vector.shape_cast %8 : vector<1x16x16xf32> to vector<16x16xf32>
    %10 = vector.shape_cast %7 : vector<16x16xf32> to vector<1x16x16xf32>
    tpu.vector_store %arg3[%c1, %c0_6, %c0_7], %10 {strides = array<i32>} : memref<4x16x16xf32, #tpu.memory_space<vmem>>, vector<1x16x16xf32>,
    %11 = vector.extract_strided_slice %2 {offsets = [0, 32], sizes = [16, 16], strides = [1, 1]} : vector<16x64xf32> to vector<16x16xf32>
    %c2 = arith.constant 2 : index
    %c0_8 = arith.constant 0 : index
    %c0_9 = arith.constant 0 : index
    %12 = vector.load %arg3[%c2, %c0_8, %c0_9] : memref<4x16x16xf32, #tpu.memory_space<vmem>>, vector<1x16x16xf32>
    %13 = vector.shape_cast %12 : vector<1x16x16xf32> to vector<16x16xf32>
    %14 = vector.shape_cast %11 : vector<16x16xf32> to vector<1x16x16xf32>
    tpu.vector_store %arg3[%c2, %c0_8, %c0_9], %14 {strides = array<i32>} : memref<4x16x16xf32, #tpu.memory_space<vmem>>, vector<1x16x16xf32>,
    %15 = vector.extract_strided_slice %2 {offsets = [0, 48], sizes = [16, 16], strides = [1, 1]} : vector<16x64xf32> to vector<16x16xf32>
    %c3 = arith.constant 3 : index
    %c0_10 = arith.constant 0 : index
    %c0_11 = arith.constant 0 : index
    %16 = vector.load %arg3[%c3, %c0_10, %c0_11] : memref<4x16x16xf32, #tpu.memory_space<vmem>>, vector<1x16x16xf32>
    %17 = vector.shape_cast %16 : vector<1x16x16xf32> to vector<16x16xf32>
    %18 = vector.shape_cast %15 : vector<16x16xf32> to vector<1x16x16xf32>
    tpu.vector_store %arg3[%c3, %c0_10, %c0_11], %18 {strides = array<i32>} : memref<4x16x16xf32, #tpu.memory_space<vmem>>, vector<1x16x16xf32>,
    return
  }
  func.func @transform_0(%arg0: i32) -> (i32, i32) {
    %c0_i32 = arith.constant 0 : i32
    %c0_i32_0 = arith.constant 0 : i32
    return %arg0, %c0_i32 : i32, i32
  }
  func.func @transform_1(%arg0: i32) -> (i32, i32) {
    %c0_i32 = arith.constant 0 : i32
    %c0_i32_0 = arith.constant 0 : i32
    %c0_i32_1 = arith.constant 0 : i32
    return %c0_i32, %c0_i32_0 : i32, i32
  }
  func.func @transform_2(%arg0: i32) -> (i32, i32, i32) {
    %c0_i32 = arith.constant 0 : i32
    %c0_i32_0 = arith.constant 0 : i32
    %c0_i32_1 = arith.constant 0 : i32
    return %c0_i32, %arg0, %c0_i32_0 : i32, i32, i32
  }
}

</mosaic_0001>

<llo_original>
// kernel: tpu_custom_call.1
$region0: #{tpu_custom_call.1}
  #allocation0 [shape = 'u32[]', space=smem, size = 0x4, offset = 0x4, fixed_abs, tag = 'smem constant byte address 0x4 - core index']
  #allocation1 [shape = 'u32[144,128]{1,0:T(1,128)}', space=vmem, size = 0x12000, scoped, tag = 'internal scratch']
  %s0 = inlined_call_operand.hbm [shape: f32[16,32], index: 0, kind: input, shape index: {}]
  %s1 = inlined_call_operand.hbm [shape: f32[32,64], index: 1, kind: input, shape index: {}]
  %s2 = inlined_call_operand.hbm [shape: f32[4,16,16], index: 2, kind: output, shape index: {}]
  %s3 = sld [smem:[#allocation0]]
  $region26: #{tpu_custom_call.1} parent=0
    _
  %s5 = ssub.s32 1, %s3
  %s6 = scalar_select 0, %s5, %s3
  $region1: #{tpu_custom_call.1} parent=0
    #allocation2 [shape = 'u8[8192]{0}', space=vmem, size = 0x2000, scoped, tag = 'input window, operand 0, single buffered']
    #allocation3 [shape = 's32[1]{0}', space=sflag, size = 0x4, scoped, tag = 'scoped memory for tpu_custom_call.1']
    #allocation4 [shape = 's32[1]{0}', space=sflag, size = 0x4, scoped, tag = 'scoped memory for tpu_custom_call.1']
    #allocation5 [shape = 'u8[16384]{0}', space=vmem, size = 0x4000, scoped, tag = 'input window, operand 1, single buffered']
    #allocation6 [shape = 's32[1]{0}', space=sflag, size = 0x4, scoped, tag = 'scoped memory for tpu_custom_call.1']
    #allocation7 [shape = 'u8[32768]{0}', space=vmem, size = 0x8000, scoped, tag = 'output window, operand 0, single buffered']
    %7 = vsyncpa [#allocation3], 0
    %8 = vsyncpa [#allocation6], 0
    %9 = vsyncpa [#allocation4], 0
    // Predicated region
    $region2: #{tpu_custom_call.1} parent=1 // pred_check
      _
    $region3: #{tpu_custom_call.1} parent=1 // pred_check_branch
      %11 = sbr.rel (0) target = $region5
    $region4: #{tpu_custom_call.1} parent=1 // pred_region
      %s13 = ssub.s32 256, 256
      %14 = vsyncadd [#allocation3], %s13
      %s15 = sshll.u32 [#allocation2], 4
      %s16 = int_to_ptr.vmem [resolvable:$true] %s15
      %21 = dma.hbm_to_vmem [thread:$0]  %s0, 256, %s16, [#allocation3], 128, 128, 8
    $region5: #{tpu_custom_call.1} parent=1 // pred_fallthru
      _
    // Predicated region
    $region6: #{tpu_custom_call.1} parent=1 // pred_check
      _
    $region7: #{tpu_custom_call.1} parent=1 // pred_check_branch
      %23 = sbr.rel (0) target = $region9
    $region8: #{tpu_custom_call.1} parent=1 // pred_region
      %s25 = ssub.s32 512, 512
      %26 = vsyncadd [#allocation6], %s25
      %s27 = sshll.u32 [#allocation5], 4
      %s28 = int_to_ptr.vmem [resolvable:$true] %s27
      %33 = dma.hbm_to_vmem [thread:$0]  %s1, 512, %s28, [#allocation6], 128, 128, 8
    $region9: #{tpu_custom_call.1} parent=1 // pred_fallthru
      _
    // Predicated region
    $region10: #{tpu_custom_call.1} parent=1 // pred_check
      _
    $region11: #{tpu_custom_call.1} parent=1 // pred_check_branch
      %35 = sbr.rel (0) target = $region13
    $region12: #{tpu_custom_call.1} parent=1 // pred_region
      %36 = dma.done [#allocation3], 256
    $region13: #{tpu_custom_call.1} parent=1 // pred_fallthru
      _
    // Predicated region
    $region14: #{tpu_custom_call.1} parent=1 // pred_check
      _
    $region15: #{tpu_custom_call.1} parent=1 // pred_check_branch
      %38 = sbr.rel (0) target = $region17
    $region16: #{tpu_custom_call.1} parent=1 // pred_region
      %39 = dma.done [#allocation6], 512
    $region17: #{tpu_custom_call.1} parent=1 // pred_fallthru
      _
    %v40 = vld [vmem:[#allocation2] sm:$0xff]
    %v41 = vld [vmem:[#allocation2 + $0x8] sm:$0xff]
    %v42 = vld [vmem:[#allocation5] sm:$0xff]
    %v43 = vld [vmem:[#allocation5 + $0x8] sm:$0xff]
    %v44 = vld [vmem:[#allocation5 + $0x10] sm:$0xff]
    %v45 = vld [vmem:[#allocation5 + $0x18] sm:$0xff]
    %vm46 = vcmask 261120
    %v48 = vsel %vm46, %v40, 0
    %v51 = vsel %vm46, %v41, 0
    %53 = vmatprep.subr.mxu0 0.0
    %54 = vmatpush1.msra.mxu0 %v42
    %55 = vmatprep.subr.mxu0 0.0
    %56 = vmatpush1.msra.mxu0 %v43
    %57 = vmatprep.subr.mxu0 0.0
    %58 = vmatpush1.msra.mxu0 %v44
    %59 = vmatprep.subr.mxu0 0.0
    %60 = vmatpush1.msra.mxu0 %v45
    %61 = vmatprep.subr.mxu0 0.0
    %62 = vmatpush1.msra.mxu0 0.0
    %63 = vmatprep.subr.mxu0 0.0
    %64 = vmatpush1.msra.mxu0 0.0
    %65 = vmatprep.subr.mxu0 0.0
    %66 = vmatpush1.msra.mxu0 0.0
    %67 = vmatprep.subr.mxu0 0.0
    %68 = vmatpush1.msra.mxu0 0.0
    %69 = vmatprep.subr.mxu0 0.0
    %70 = vmatpush1.msra.mxu0 0.0
    %71 = vmatprep.subr.mxu0 0.0
    %72 = vmatpush1.msra.mxu0 0.0
    %73 = vmatprep.subr.mxu0 0.0
    %74 = vmatpush1.msra.mxu0 0.0
    %75 = vmatprep.subr.mxu0 0.0
    %76 = vmatpush1.msra.mxu0 0.0
    %77 = vmatprep.subr.mxu0 0.0
    %78 = vmatpush1.msra.mxu0 0.0
    %79 = vmatprep.subr.mxu0 0.0
    %80 = vmatpush1.msra.mxu0 0.0
    %81 = vmatprep.subr.mxu0 0.0
    %82 = vmatpush1.msra.mxu0 0.0
    %83 = vmatprep.subr.mxu0 0.0
    %84 = vmatpush1.msra.mxu0 0.0
    %85 = vmatprep.subr.mxu0 0.0
    %86 = vmatpush1.msra.mxu0 0.0
    %87 = vmatprep.subr.mxu0 0.0
    %88 = vmatpush1.msra.mxu0 0.0
    %89 = vmatprep.subr.mxu0 0.0
    %90 = vmatpush1.msra.mxu0 0.0
    %91 = vmatprep.subr.mxu0 0.0
    %92 = vmatpush1.msra.mxu0 0.0
    %93 = vmatprep.subr.mxu0 0.0
    %94 = vmatpush1.msra.mxu0 0.0
    %95 = vmatprep.subr.mxu0 0.0
    %96 = vmatpush1.msra.mxu0 0.0
    %97 = vmatprep.subr.mxu0 0.0
    %98 = vmatpush1.msra.mxu0 0.0
    %99 = vmatprep.subr.mxu0 0.0
    %100 = vmatpush1.msra.mxu0 0.0
    %101 = vmatprep.subr.mxu0 0.0
    %102 = vmatpush1.msra.mxu0 0.0
    %103 = vmatprep.subr.mxu0 0.0
    %104 = vmatpush1.msra.mxu0 0.0
    %105 = vmatprep.subr.mxu0 0.0
    %106 = vmatpush1.msra.mxu0 0.0
    %107 = vmatprep.subr.mxu0 0.0
    %108 = vmatpush1.msra.mxu0 0.0
    %109 = vmatprep.subr.mxu0 0.0
    %110 = vmatpush1.msra.mxu0 0.0
    %111 = vmatprep.subr.mxu0 0.0
    %112 = vmatpush1.msra.mxu0 0.0
    %113 = vmatprep.subr.mxu0 0.0
    %114 = vmatpush1.msra.mxu0 0.0
    %115 = vmatprep.subr.mxu0 0.0
    %116 = vmatpush1.msra.mxu0 0.0
    %117 = vmatprep.mubr.f32.mxu0 0.0
    %118 = vmatmul.mubr.f32.gmra.mrb[0].mxu0 %v48
    %v119 = vpop.f32.mrb[0].mxu0
    %v120 = vadd.f32 0.0, %v119
    %v121 = vpop.f32.mrb[0].mxu0
    %122 = vmatprep.mubr.f32.mxu0 0.0
    %123 = vmatmul.mubr.f32.gmra.mrb[0].mxu0 %v51
    %v124 = vpop.f32.mrb[0].mxu0
    %v125 = vadd.f32 0.0, %v124
    %v126 = vpop.f32.mrb[0].mxu0
    %127 = vdwg.mxu0
    %vm128 = vcmask 130048
    %129 = vst.msk [vmem:[#allocation7] sm:$0xff] %vm128, %v120
    %130 = vst.msk [vmem:[#allocation7 + $0x8] sm:$0xff] %vm128, %v125
    %133 = vrot.lane.b32.xlu0 %v120, 112
    %v134 = vpop.permute.xlu0 %133
    %135 = vrot.lane.b32.xlu0 %v125, 112
    %v136 = vpop.permute.xlu0 %135
    %s139 = scalar_lea.vmem [#allocation7], 16
    %140 = vst.msk [vmem:[%s139] sm:$0xff] %vm128, %v134
    %141 = vst.msk [vmem:[%s139 + $0x8] sm:$0xff] %vm128, %v136
    %142 = vrot.lane.b32.xlu0 %v120, 96
    %v143 = vpop.permute.xlu0 %142
    %144 = vrot.lane.b32.xlu0 %v125, 96
    %v145 = vpop.permute.xlu0 %144
    %s148 = scalar_lea.vmem [#allocation7], 32
    %149 = vst.msk [vmem:[%s148] sm:$0xff] %vm128, %v143
    %150 = vst.msk [vmem:[%s148 + $0x8] sm:$0xff] %vm128, %v145
    %151 = vrot.lane.b32.xlu0 %v120, 80
    %v152 = vpop.permute.xlu0 %151
    %153 = vrot.lane.b32.xlu0 %v125, 80
    %v154 = vpop.permute.xlu0 %153
    %s157 = scalar_lea.vmem [#allocation7], 48
    %158 = vst.msk [vmem:[%s157] sm:$0xff] %vm128, %v152
    %159 = vst.msk [vmem:[%s157 + $0x8] sm:$0xff] %vm128, %v154
    // Predicated region
    $region18: #{tpu_custom_call.1} parent=1 // pred_check
      _
    $region19: #{tpu_custom_call.1} parent=1 // pred_check_branch
      %161 = sbr.rel (0) target = $region21
    $region20: #{tpu_custom_call.1} parent=1 // pred_region
      %s163 = ssub.s32 1024, 1024
      %164 = vsyncadd [#allocation4], %s163
      %s165 = sshll.u32 [#allocation7], 4
      %s166 = int_to_ptr.vmem [resolvable:$true] %s165
      %171 = dma.vmem_to_hbm [thread:$0]  %s166, 1024, %s2, [#allocation4], 128, 128, 8
    $region21: #{tpu_custom_call.1} parent=1 // pred_fallthru
      _
    // Predicated region
    $region22: #{tpu_custom_call.1} parent=1 // pred_check
      _
    $region23: #{tpu_custom_call.1} parent=1 // pred_check_branch
      %173 = sbr.rel (0) target = $region25
    $region24: #{tpu_custom_call.1} parent=1 // pred_region
      %174 = dma.done [#allocation4], 1024
    $region25: #{tpu_custom_call.1} parent=1 // pred_fallthru
      _
    %175 = vsyncpa [#allocation3], 1
    %176 = vsyncpa [#allocation6], 1
    %177 = vsyncpa [#allocation4], 1

</llo_original>
